<compile_context>
chip_gen: v5e
topology: v5e:2x2
jax: 0.10.0
libtpu: 0.0.40
codegen_flags: <defaults>
</compile_context>

<pallas_src>
import functools

import jax
import jax.numpy as jnp
from jax.experimental import pallas as pl
from jax.experimental.pallas import tpu as pltpu


def _round_up(x, m):
    return (x + m - 1) // m * m


def _pad_last(x, to):
    pad = to - x.shape[-1]
    if pad == 0:
        return x
    widths = [(0, 0)] * (x.ndim - 1) + [(0, pad)]
    return jnp.pad(x, widths)


def _bahdanau_kernel(enc_ref, decatt_ref, cov_ref,
                     wenc_ref, wcov_ref, wfull_ref,
                     ctx_ref, alpha_ref, covout_ref,
                     *, p_valid):
    bblk, p, e = enc_ref.shape
    a = wenc_ref.shape[1]

    dec_att = decatt_ref[...]                             # [Bb, A]   (all biases folded in)
    cov = cov_ref[...]                                    # [Bb, P]   (lane-dense)

    # Encoder projection: ONE flattened [Bb*P, E] @ [E, A] MXU matmul.
    # P is a multiple of 8, so the reshape is a free sublane reinterpretation.
    enc2 = enc_ref[...].reshape(bblk * p, e)
    enc_att = jnp.dot(enc2, wenc_ref[...],
                      preferred_element_type=jnp.float32).reshape(bblk, p, a)

    # Coverage projection Linear(1 -> A), bias folded out: VPU broadcast-multiply.
    cov_att = cov[:, :, None] * wcov_ref[...]             # [Bb, P, A]

    att = jnp.tanh(enc_att + dec_att[:, None, :] + cov_att)   # [Bb, P, A] (A lane-dense)

    # Linear(A -> 1) score: VPU mul + lane reduce. b_full dropped (softmax no-op).
    score = jnp.sum(att * wfull_ref[...], axis=-1)        # [Bb, P]

    if p_valid < p:
        lane = jax.lax.broadcasted_iota(jnp.int32, (bblk, p), 1)
        score = jnp.where(lane < p_valid, score, jnp.float32(-1e30))

    # Softmax over P (lane axis).
    m = jnp.max(score, axis=-1, keepdims=True)
    ex = jnp.exp(score - m)
    denom = jnp.sum(ex, axis=-1, keepdims=True)
    alpha = ex * pl.reciprocal(denom, approx=False)       # [Bb, P]

    # Context: VPU multiply + sublane reduce (no 1-row MXU matmuls).
    enc_f32 = enc_ref[...].astype(jnp.float32)
    ctx = jnp.sum(enc_f32 * alpha[:, :, None], axis=1)    # [Bb, E]

    ctx_ref[...] = ctx.astype(ctx_ref.dtype)
    alpha_ref[...] = alpha.astype(alpha_ref.dtype)
    covout_ref[...] = (cov + alpha).astype(covout_ref.dtype)


def _choose_block_b(B, P_pad, E, A_pad, vmem_budget_bytes=20 << 20):
    """Pick the batch block: >=512 MXU rows / ~1 MiB encoder tile, capped by VMEM."""
    enc_row_bytes = P_pad * E * 4
    tgt = max(pl.cdiv(512, P_pad), pl.cdiv(1 << 20, enc_row_bytes))
    # Per-batch-row VMEM estimate (f32): double-buffered enc tile, three
    # [P, A] intermediates, in/out slabs.
    per_b = 4 * (2 * P_pad * E + 3 * P_pad * A_pad + 6 * P_pad + 4 * E + 2 * A_pad)
    fixed = 8 * (E * A_pad + 2 * A_pad)                   # weights, double-buffered
    cap = max((vmem_budget_bytes - fixed) // per_b, 1)
    bb = max(min(tgt, cap), 1)
    bb = _round_up(bb, 8)
    bb = min(bb, _round_up(B, 8))                         # don't pad far past B
    return bb


def bahdanau_attention(encoder_out, decoder_hidden, params, coverage=None,
                       use_bf16=False):
    """Pallas forward of BahdanauAttention.

    Returns (context [B, E], alpha [B, P], new_coverage [B, P, 1]).
    """
    B, P, E = encoder_out.shape
    A = params["W_enc"].shape[1]
    out_dtype = encoder_out.dtype

    if coverage is None:
        coverage = jnp.zeros((B, P, 1), encoder_out.dtype)
    cov2 = coverage[..., 0].astype(jnp.float32)           # [B, P]

    enc = encoder_out.astype(jnp.float32)

    # Hoisted decoder projection with ALL biases folded in (bit-equivalent add order
    # up to fp rounding): enc_att + dec_att + cov_att + b_enc + b_dec + b_cov.
    dec_att = (decoder_hidden.astype(jnp.float32) @ params["W_dec"]
               + params["b_dec"] + params["b_enc"] + params["b_cov"])     # [B, A]

    # Pad the attention dim to a lane-dense multiple of 128. Padded columns stay
    # exactly zero through tanh and multiply against zero w_full columns.
    A_pad = _round_up(A, 128)
    w_enc = _pad_last(params["W_enc"].astype(jnp.float32), A_pad)         # [E, A_pad]
    w_cov = _pad_last(params["w_cov"].astype(jnp.float32), A_pad)         # [1, A_pad]
    w_full_row = _pad_last(params["w_full"].T.astype(jnp.float32), A_pad)  # [1, A_pad]
    dec_att = _pad_last(dec_att, A_pad)                                    # [B, A_pad]
    # b_full is dropped: a scalar added before softmax cannot change the output.

    # Pad P to a sublane multiple of 8 (free flattened-matmul reshape); padded
    # pixels are masked inside the kernel.
    P_pad = _round_up(P, 8)
    if P_pad != P:
        enc = jnp.pad(enc, ((0, 0), (0, P_pad - P), (0, 0)))
        cov2 = jnp.pad(cov2, ((0, 0), (0, P_pad - P)))

    if use_bf16:
        enc = enc.astype(jnp.bfloat16)
        w_enc = w_enc.astype(jnp.bfloat16)

    # Batch blocking sized from the VMEM budget.
    B_blk = _choose_block_b(B, P_pad, E, A_pad)
    n_blocks = pl.cdiv(B, B_blk)
    B_pad = n_blocks * B_blk
    if B_pad != B:
        pad = B_pad - B
        enc = jnp.pad(enc, ((0, pad), (0, 0), (0, 0)))
        dec_att = jnp.pad(dec_att, ((0, pad), (0, 0)))
        cov2 = jnp.pad(cov2, ((0, pad), (0, 0)))

    const2 = lambda i: (0, 0)
    grid_spec = pltpu.PrefetchScalarGridSpec(
        num_scalar_prefetch=0,
        grid=(n_blocks,),
        in_specs=[
            pl.BlockSpec((B_blk, P_pad, E), lambda i: (i, 0, 0)),   # encoder_out
            pl.BlockSpec((B_blk, A_pad), lambda i: (i, 0)),         # dec_att (+ biases)
            pl.BlockSpec((B_blk, P_pad), lambda i: (i, 0)),         # coverage
            pl.BlockSpec((E, A_pad), const2),                       # W_enc (VMEM-resident)
            pl.BlockSpec((1, A_pad), const2),                       # w_cov
            pl.BlockSpec((1, A_pad), const2),                       # w_full (row)
        ],
        out_specs=[
            pl.BlockSpec((B_blk, E), lambda i: (i, 0)),             # context
            pl.BlockSpec((B_blk, P_pad), lambda i: (i, 0)),         # alpha
            pl.BlockSpec((B_blk, P_pad), lambda i: (i, 0)),         # coverage out
        ],
    )

    out_shapes = (
        jax.ShapeDtypeStruct((B_pad, E), jnp.float32),
        jax.ShapeDtypeStruct((B_pad, P_pad), jnp.float32),
        jax.ShapeDtypeStruct((B_pad, P_pad), jnp.float32),
    )

    kernel = functools.partial(_bahdanau_kernel, p_valid=P)

    ctx, alpha, cov_new = pl.pallas_call(
        kernel,
        out_shape=out_shapes,
        grid_spec=grid_spec,
        compiler_params=pltpu.CompilerParams(
            dimension_semantics=("parallel",),
            vmem_limit_bytes=32 * 1024 * 1024),
    )(enc, dec_att, cov2, w_enc, w_cov, w_full_row)

    # Slice off batch / pixel padding (required for correctness — do not remove).
    ctx = ctx[:B].astype(out_dtype)
    alpha = alpha[:B, :P].astype(out_dtype)
    cov_out = cov_new[:B, :P][..., None].astype(out_dtype)
    return ctx, alpha, cov_out


def bahdanau_reference(encoder_out, decoder_hidden, params, coverage=None):
    """Pure-JAX reference matching the PyTorch forward."""
    B, P, _ = encoder_out.shape
    if coverage is None:
        coverage = jnp.zeros((B, P, 1), encoder_out.dtype)
    enc_att = encoder_out @ params["W_enc"] + params["b_enc"][0]
    dec_att = (decoder_hidden @ params["W_dec"] + params["b_dec"][0])[:, None, :]
    cov_att = coverage * params["w_cov"][0] + params["b_cov"][0]
    att = jnp.tanh(enc_att + dec_att + cov_att)
    score = (att @ params["w_full"] + params["b_full"][0])[..., 0]        # [B, P]
    alpha = jax.nn.softmax(score, axis=1)
    ctx = jnp.sum(encoder_out * alpha[..., None], axis=1)
    return ctx, alpha, coverage + alpha[..., None]


def init_params(key, encoder_dim, decoder_dim, attention_dim):
    ks = jax.random.split(key, 8)
    s = 0.1
    return {
        "W_enc": s * jax.random.normal(ks[0], (encoder_dim, attention_dim), jnp.float32),
        "b_enc": s * jax.random.normal(ks[1], (1, attention_dim), jnp.float32),
        "W_dec": s * jax.random.normal(ks[2], (decoder_dim, attention_dim), jnp.float32),
        "b_dec": s * jax.random.normal(ks[3], (1, attention_dim), jnp.float32),
        "w_cov": s * jax.random.normal(ks[4], (1, attention_dim), jnp.float32),
        "b_cov": s * jax.random.normal(ks[5], (1, attention_dim), jnp.float32),
        "w_full": s * jax.random.normal(ks[6], (attention_dim, 1), jnp.float32),
        "b_full": s * jax.random.normal(ks[7], (1, 1), jnp.float32),
    }


if __name__ == "__main__":
    B, P, E, D, A = 2, 16, 32, 32, 32   # batch, num_pixels, encoder/decoder/attention dims

    key = jax.random.PRNGKey(0)
    k_enc, k_dec, k_cov, k_par = jax.random.split(key, 4)

    encoder_out = jax.random.normal(k_enc, (B, P, E), jnp.float32)
    decoder_hidden = jax.random.normal(k_dec, (B, D), jnp.float32)
    coverage = 0.1 * jax.random.uniform(k_cov, (B, P, 1), jnp.float32)
    params = init_params(k_par, E, D, A)

    # 1) small-batch path (single block, batch padded to a sublane multiple)
    ctx, alpha, cov_new = bahdanau_attention(encoder_out, decoder_hidden, params, coverage)
    jax.block_until_ready((ctx, alpha, cov_new))
    ctx_r, alpha_r, cov_r = bahdanau_reference(encoder_out, decoder_hidden, params, coverage)
    assert jnp.allclose(ctx, ctx_r, atol=1e-5, rtol=1e-5)
    assert jnp.allclose(alpha, alpha_r, atol=1e-5, rtol=1e-5)
    assert jnp.allclose(cov_new, cov_r, atol=1e-5, rtol=1e-5)

    # 2) coverage=None path (PyTorch default)
    ctx2, alpha2, cov2 = bahdanau_attention(encoder_out, decoder_hidden, params, None)
    jax.block_until_ready((ctx2, alpha2, cov2))
    ctx2_r, alpha2_r, cov2_r = bahdanau_reference(encoder_out, decoder_hidden, params, None)
    assert jnp.allclose(ctx2, ctx2_r, atol=1e-5, rtol=1e-5)
    assert jnp.allclose(alpha2, alpha2_r, atol=1e-5, rtol=1e-5)
    assert jnp.allclose(cov2, cov2_r, atol=1e-5, rtol=1e-5)

    # 3) batch not a multiple of the block AND P not a multiple of 8:
    #    exercises batch padding and the in-kernel pixel mask.
    B2, P2 = 10, 14
    k_enc2, k_dec2, k_cov2 = jax.random.split(jax.random.PRNGKey(1), 3)
    encoder_out2 = jax.random.normal(k_enc2, (B2, P2, E), jnp.float32)
    decoder_hidden2 = jax.random.normal(k_dec2, (B2, D), jnp.float32)
    coverage2 = 0.1 * jax.random.uniform(k_cov2, (B2, P2, 1), jnp.float32)

    ctx3, alpha3, cov3 = bahdanau_attention(encoder_out2, decoder_hidden2, params, coverage2)
    jax.block_until_ready((ctx3, alpha3, cov3))
    ctx3_r, alpha3_r, cov3_r = bahdanau_reference(encoder_out2, decoder_hidden2, params, coverage2)
    assert jnp.allclose(ctx3, ctx3_r, atol=1e-5, rtol=1e-5)
    assert jnp.allclose(alpha3, alpha3_r, atol=1e-5, rtol=1e-5)
    assert jnp.allclose(cov3, cov3_r, atol=1e-5, rtol=1e-5)

    # 4) bf16 encoder/W_enc operands (HBM-bound regime on v6e/v7x), looser tolerance.
    ctx4, alpha4, cov4 = bahdanau_attention(encoder_out, decoder_hidden, params, coverage,
                                            use_bf16=True)
    jax.block_until_ready((ctx4, alpha4, cov4))
    assert jnp.allclose(ctx4, ctx_r, atol=5e-2, rtol=5e-2)
    assert jnp.allclose(alpha4, alpha_r, atol=5e-2, rtol=5e-2)

    print("KERNEL_OK")
</pallas_src>

<mosaic_0001>
module attributes {stable_mosaic.version = 11 : i64} {
  func.func @_bahdanau_kernel(%arg0: i32, %arg1: memref<8x16x32xf32, #tpu.memory_space<vmem>>, %arg2: memref<8x128xf32, #tpu.memory_space<vmem>>, %arg3: memref<8x16xf32, #tpu.memory_space<vmem>>, %arg4: memref<32x128xf32, #tpu.memory_space<vmem>>, %arg5: memref<1x128xf32, #tpu.memory_space<vmem>>, %arg6: memref<1x128xf32, #tpu.memory_space<vmem>>, %arg7: memref<8x32xf32, #tpu.memory_space<vmem>>, %arg8: memref<8x16xf32, #tpu.memory_space<vmem>>, %arg9: memref<8x16xf32, #tpu.memory_space<vmem>>) attributes {dimension_semantics = [#tpu.dimension_semantics<parallel>], iteration_bounds = array<i64: 1>, scalar_prefetch = 0 : i64, scratch_operands = 0 : i64, tpu.core_type = #tpu.core_type<tc>, window_params = [{transform_indices = @transform_0, window_bounds = array<i64: 8, 16, 32>}, {transform_indices = @transform_1, window_bounds = array<i64: 8, 128>}, {transform_indices = @transform_2, window_bounds = array<i64: 8, 16>}, {pipeline_mode = #tpu.pipeline_mode<synchronous>, transform_indices = @transform_3, window_bounds = array<i64: 32, 128>}, {pipeline_mode = #tpu.pipeline_mode<synchronous>, transform_indices = @transform_4, window_bounds = array<i64: 1, 128>}, {pipeline_mode = #tpu.pipeline_mode<synchronous>, transform_indices = @transform_5, window_bounds = array<i64: 1, 128>}, {transform_indices = @transform_6, window_bounds = array<i64: 8, 32>}, {transform_indices = @transform_7, window_bounds = array<i64: 8, 16>}, {transform_indices = @transform_8, window_bounds = array<i64: 8, 16>}]} {
    %c0 = arith.constant 0 : index
    %c0_0 = arith.constant 0 : index
    %0 = vector.load %arg2[%c0, %c0_0] : memref<8x128xf32, #tpu.memory_space<vmem>>, vector<8x128xf32>
    %c0_1 = arith.constant 0 : index
    %c0_2 = arith.constant 0 : index
    %1 = vector.load %arg3[%c0_1, %c0_2] : memref<8x16xf32, #tpu.memory_space<vmem>>, vector<8x16xf32>
    %c0_3 = arith.constant 0 : index
    %c0_4 = arith.constant 0 : index
    %c0_5 = arith.constant 0 : index
    %2 = vector.load %arg1[%c0_3, %c0_4, %c0_5] : memref<8x16x32xf32, #tpu.memory_space<vmem>>, vector<8x16x32xf32>
    %3 = vector.shape_cast %2 : vector<8x16x32xf32> to vector<128x32xf32>
    %c0_6 = arith.constant 0 : index
    %c0_7 = arith.constant 0 : index
    %4 = vector.load %arg4[%c0_6, %c0_7] : memref<32x128xf32, #tpu.memory_space<vmem>>, vector<32x128xf32>
    %cst = arith.constant dense<0.000000e+00> : vector<128x128xf32>
    %5 = tpu.matmul %3, %4, %cst {dimension_numbers = #tpu.dot_dimension_numbers<[1], [0], [0], [1], [0, 0, 1, 1], [], []>} : vector<128x32xf32>, vector<32x128xf32>, vector<128x128xf32> -> vector<128x128xf32>
    %6 = vector.shape_cast %5 : vector<128x128xf32> to vector<8x16x128xf32>
    %7 = vector.shape_cast %1 : vector<8x16xf32> to vector<8x16x1xf32>
    %c0_8 = arith.constant 0 : index
    %c0_9 = arith.constant 0 : index
    %8 = vector.load %arg5[%c0_8, %c0_9] : memref<1x128xf32, #tpu.memory_space<vmem>>, vector<1x128xf32>
    %9 = vector.shape_cast %8 : vector<1x128xf32> to vector<1x1x128xf32>
    %10 = vector.broadcast %7 : vector<8x16x1xf32> to vector<8x16x128xf32>
    %11 = vector.broadcast %9 : vector<1x1x128xf32> to vector<8x16x128xf32>
    %12 = arith.mulf %10, %11 : vector<8x16x128xf32>
    %13 = vector.shape_cast %0 : vector<8x128xf32> to vector<8x1x128xf32>
    %14 = vector.broadcast %13 : vector<8x1x128xf32> to vector<8x16x128xf32>
    %15 = arith.addf %6, %14 : vector<8x16x128xf32>
    %16 = arith.addf %15, %12 : vector<8x16x128xf32>
    %17 = math.tanh %16 : vector<8x16x128xf32>
    %c0_10 = arith.constant 0 : index
    %c0_11 = arith.constant 0 : index
    %18 = vector.load %arg6[%c0_10, %c0_11] : memref<1x128xf32, #tpu.memory_space<vmem>>, vector<1x128xf32>
    %19 = vector.shape_cast %18 : vector<1x128xf32> to vector<1x1x128xf32>
    %20 = vector.broadcast %19 : vector<1x1x128xf32> to vector<8x16x128xf32>
    %21 = arith.mulf %17, %20 : vector<8x16x128xf32>
    %cst_12 = arith.constant dense<0.000000e+00> : vector<8x16xf32>
    %22 = vector.multi_reduction <add>, %21, %cst_12 [2] : vector<8x16x128xf32> to vector<8x16xf32>
    %cst_13 = arith.constant dense<0xFF800000> : vector<8xf32>
    %23 = vector.multi_reduction <maximumf>, %22, %cst_13 [1] : vector<8x16xf32> to vector<8xf32>
    %24 = vector.shape_cast %23 : vector<8xf32> to vector<8x1xf32>
    %25 = vector.broadcast %24 : vector<8x1xf32> to vector<8x16xf32>
    %26 = arith.subf %22, %25 : vector<8x16xf32>
    %27 = math.exp %26 : vector<8x16xf32>
    %cst_14 = arith.constant dense<0.000000e+00> : vector<8xf32>
    %28 = vector.multi_reduction <add>, %27, %cst_14 [1] : vector<8x16xf32> to vector<8xf32>
    %29 = vector.shape_cast %28 : vector<8xf32> to vector<8x1xf32>
    %30 = tpu.reciprocal %29 : vector<8x1xf32> -> vector<8x1xf32>
    %31 = vector.broadcast %30 : vector<8x1xf32> to vector<8x16xf32>
    %32 = arith.mulf %27, %31 : vector<8x16xf32>
    %c0_15 = arith.constant 0 : index
    %c0_16 = arith.constant 0 : index
    %c0_17 = arith.constant 0 : index
    %33 = vector.load %arg1[%c0_15, %c0_16, %c0_17] : memref<8x16x32xf32, #tpu.memory_space<vmem>>, vector<8x16x32xf32>
    %34 = vector.shape_cast %32 : vector<8x16xf32> to vector<8x16x1xf32>
    %35 = vector.broadcast %34 : vector<8x16x1xf32> to vector<8x16x32xf32>
    %36 = arith.mulf %33, %35 : vector<8x16x32xf32>
    %cst_18 = arith.constant dense<0.000000e+00> : vector<8x32xf32>
    %37 = vector.multi_reduction <add>, %36, %cst_18 [1] : vector<8x16x32xf32> to vector<8x32xf32>
    %c0_19 = arith.constant 0 : index
    %c0_20 = arith.constant 0 : index
    %38 = vector.load %arg7[%c0_19, %c0_20] : memref<8x32xf32, #tpu.memory_space<vmem>>, vector<8x32xf32>
    tpu.vector_store %arg7[%c0_19, %c0_20], %37 {strides = array<i32>} : memref<8x32xf32, #tpu.memory_space<vmem>>, vector<8x32xf32>,
    %c0_21 = arith.constant 0 : index
    %c0_22 = arith.constant 0 : index
    %39 = vector.load %arg8[%c0_21, %c0_22] : memref<8x16xf32, #tpu.memory_space<vmem>>, vector<8x16xf32>
    tpu.vector_store %arg8[%c0_21, %c0_22], %32 {strides = array<i32>} : memref<8x16xf32, #tpu.memory_space<vmem>>, vector<8x16xf32>,
    %40 = arith.addf %1, %32 : vector<8x16xf32>
    %c0_23 = arith.constant 0 : index
    %c0_24 = arith.constant 0 : index
    %41 = vector.load %arg9[%c0_23, %c0_24] : memref<8x16xf32, #tpu.memory_space<vmem>>, vector<8x16xf32>
    tpu.vector_store %arg9[%c0_23, %c0_24], %40 {strides = array<i32>} : memref<8x16xf32, #tpu.memory_space<vmem>>, vector<8x16xf32>,
    return
  }
  func.func @transform_0(%arg0: i32) -> (i32, i32, i32) {
    %c0_i32 = arith.constant 0 : i32
    %c0_i32_0 = arith.constant 0 : i32
    %c0_i32_1 = arith.constant 0 : i32
    return %arg0, %c0_i32, %c0_i32_0 : i32, i32, i32
  }
  func.func @transform_1(%arg0: i32) -> (i32, i32) {
    %c0_i32 = arith.constant 0 : i32
    %c0_i32_0 = arith.constant 0 : i32
    return %arg0, %c0_i32 : i32, i32
  }
  func.func @transform_2(%arg0: i32) -> (i32, i32) {
    %c0_i32 = arith.constant 0 : i32
    %c0_i32_0 = arith.constant 0 : i32
    return %arg0, %c0_i32 : i32, i32
  }
  func.func @transform_3(%arg0: i32) -> (i32, i32) {
    %c0_i32 = arith.constant 0 : i32
    %c0_i32_0 = arith.constant 0 : i32
    %c0_i32_1 = arith.constant 0 : i32
    return %c0_i32, %c0_i32_0 : i32, i32
  }
  func.func @transform_4(%arg0: i32) -> (i32, i32) {
    %c0_i32 = arith.constant 0 : i32
    %c0_i32_0 = arith.constant 0 : i32
    %c0_i32_1 = arith.constant 0 : i32
    return %c0_i32, %c0_i32_0 : i32, i32
  }
  func.func @transform_5(%arg0: i32) -> (i32, i32) {
    %c0_i32 = arith.constant 0 : i32
    %c0_i32_0 = arith.constant 0 : i32
    %c0_i32_1 = arith.constant 0 : i32
    return %c0_i32, %c0_i32_0 : i32, i32
  }
  func.func @transform_6(%arg0: i32) -> (i32, i32) {
    %c0_i32 = arith.constant 0 : i32
    %c0_i32_0 = arith.constant 0 : i32
    return %arg0, %c0_i32 : i32, i32
  }
  func.func @transform_7(%arg0: i32) -> (i32, i32) {
    %c0_i32 = arith.constant 0 : i32
    %c0_i32_0 = arith.constant 0 : i32
    return %arg0, %c0_i32 : i32, i32
  }
  func.func @transform_8(%arg0: i32) -> (i32, i32) {
    %c0_i32 = arith.constant 0 : i32
    %c0_i32_0 = arith.constant 0 : i32
    return %arg0, %c0_i32 : i32, i32
  }
}

</mosaic_0001>

<llo_original>
// kernel: tpu_custom_call.1
$region0: #{tpu_custom_call.1}
  #allocation0 [shape = 'u32[]', space=smem, size = 0x4, offset = 0x4, fixed_abs, tag = 'smem constant byte address 0x4 - core index']
  #allocation1 [shape = 'u32[72,128]{1,0:T(1,128)}', space=vmem, size = 0x9000, scoped, tag = 'internal scratch']
  %s0 = inlined_call_operand.hbm [shape: f32[8,16,32], index: 0, kind: input, shape index: {}]
  %s1 = inlined_call_operand.hbm [shape: f32[8,128], index: 1, kind: input, shape index: {}]
  %s2 = inlined_call_operand.hbm [shape: f32[8,16], index: 2, kind: input, shape index: {}]
  %s3 = inlined_call_operand.hbm [shape: f32[32,128], index: 3, kind: input, shape index: {}]
  %s4 = inlined_call_operand.vmem [shape: f32[1,128], index: 4, kind: input, shape index: {}]
  %s5 = inlined_call_operand.vmem [shape: f32[1,128], index: 5, kind: input, shape index: {}]
  %s6 = inlined_call_operand.hbm [shape: f32[8,32], index: 6, kind: output, shape index: {0}]
  %s7 = inlined_call_operand.hbm [shape: f32[8,16], index: 7, kind: output, shape index: {1}]
  %s8 = inlined_call_operand.hbm [shape: f32[8,16], index: 8, kind: output, shape index: {2}]
  %9 = xla_tuple %s6, %s7, %s8
  %s10 = sld [smem:[#allocation0]]
  $region66: #{tpu_custom_call.1} parent=0
    _
  %s12 = ssub.s32 1, %s10
  %s13 = scalar_select 0, %s12, %s10
  $region1: #{tpu_custom_call.1} parent=0
    #allocation2 [shape = 'u8[65536]{0}', space=vmem, size = 0x10000, scoped, tag = 'input window, operand 0, single buffered']
    #allocation3 [shape = 's32[1]{0}', space=sflag, size = 0x4, scoped, tag = 'scoped memory for tpu_custom_call.1']
    #allocation4 [shape = 's32[1]{0}', space=sflag, size = 0x4, scoped, tag = 'scoped memory for tpu_custom_call.1']
    #allocation5 [shape = 'u8[4096]{0}', space=vmem, size = 0x1000, scoped, tag = 'input window, operand 1, single buffered']
    #allocation6 [shape = 's32[1]{0}', space=sflag, size = 0x4, scoped, tag = 'scoped memory for tpu_custom_call.1']
    #allocation7 [shape = 'u8[4096]{0}', space=vmem, size = 0x1000, scoped, tag = 'input window, operand 2, single buffered']
    #allocation8 [shape = 'u8[16384]{0}', space=vmem, size = 0x4000, scoped, tag = 'input window, operand 3, single buffered']
    #allocation9 [shape = 's32[1]{0}', space=sflag, size = 0x4, scoped, tag = 'scoped memory for tpu_custom_call.1']
    #allocation10 [shape = 'u8[4096]{0}', space=vmem, size = 0x1000, scoped, tag = 'output window, operand 0, single buffered']
    #allocation11 [shape = 'u8[4096]{0}', space=vmem, size = 0x1000, scoped, tag = 'output window, operand 1, single buffered']
    #allocation12 [shape = 's32[1]{0}', space=sflag, size = 0x4, scoped, tag = 'scoped memory for tpu_custom_call.1']
    #allocation13 [shape = 'u8[4096]{0}', space=vmem, size = 0x1000, scoped, tag = 'output window, operand 2, single buffered']
    %14 = vsyncpa [#allocation3], 0
    %15 = vsyncpa [#allocation6], 0
    %16 = vsyncpa [#allocation9], 0
    %17 = vsyncpa [#allocation4], 0
    %18 = vsyncpa [#allocation12], 0
    // Predicated region
    $region2: #{tpu_custom_call.1} parent=1 // pred_check
      _
    $region3: #{tpu_custom_call.1} parent=1 // pred_check_branch
      %20 = sbr.rel (0) target = $region5
    $region4: #{tpu_custom_call.1} parent=1 // pred_region
      %22 = vsyncadd [#allocation3], 0
      %s23 = sshll.u32 %s0, 4
      %s24 = int_to_ptr.hbm [resolvable:$true] %s23
      %s25 = sshll.u32 [#allocation2], 4
      %s26 = int_to_ptr.vmem [resolvable:$true] %s25
      %31 = dma.hbm_to_vmem [thread:$0]  %s24, 2048, %s26, [#allocation3], 128, 128, 8
    $region5: #{tpu_custom_call.1} parent=1 // pred_fallthru
      _
    // Predicated region
    $region6: #{tpu_custom_call.1} parent=1 // pred_check
      _
    $region7: #{tpu_custom_call.1} parent=1 // pred_check_branch
      %33 = sbr.rel (0) target = $region9
    $region8: #{tpu_custom_call.1} parent=1 // pred_region
      %35 = vsyncadd [#allocation6], 0
      %s37 = sshll.u32 %s1, 4
      %s38 = int_to_ptr.hbm [resolvable:$true] %s37
      %s39 = sshll.u32 [#allocation5], 4
      %s40 = int_to_ptr.vmem [resolvable:$true] %s39
      %42 = dma.hbm_to_vmem [thread:$0]  %s38, 128, %s40, [#allocation6]
    $region9: #{tpu_custom_call.1} parent=1 // pred_fallthru
      _
    // Predicated region
    $region10: #{tpu_custom_call.1} parent=1 // pred_check
      _
    $region11: #{tpu_custom_call.1} parent=1 // pred_check_branch
      %44 = sbr.rel (0) target = $region13
    $region12: #{tpu_custom_call.1} parent=1 // pred_region
      %46 = vsyncadd [#allocation6], 0
      %s48 = sshll.u32 %s2, 4
      %s49 = int_to_ptr.hbm [resolvable:$true] %s48
      %s50 = sshll.u32 [#allocation7], 4
      %s51 = int_to_ptr.vmem [resolvable:$true] %s50
      %53 = dma.hbm_to_vmem [thread:$0]  %s49, 128, %s51, [#allocation6]
    $region13: #{tpu_custom_call.1} parent=1 // pred_fallthru
      _
    // Predicated region
    $region14: #{tpu_custom_call.1} parent=1 // pred_check
      _
    $region15: #{tpu_custom_call.1} parent=1 // pred_check_branch
      %55 = sbr.rel (0) target = $region17
    $region16: #{tpu_custom_call.1} parent=1 // pred_region
      %57 = vsyncadd [#allocation9], 0
      %s58 = sshll.u32 %s3, 4
      %s59 = int_to_ptr.hbm [resolvable:$true] %s58
      %s60 = sshll.u32 [#allocation8], 4
      %s61 = int_to_ptr.vmem [resolvable:$true] %s60
      %66 = dma.hbm_to_vmem [thread:$0]  %s59, 512, %s61, [#allocation9], 128, 128, 8
    $region17: #{tpu_custom_call.1} parent=1 // pred_fallthru
      _
    // Predicated region
    $region18: #{tpu_custom_call.1} parent=1 // pred_check
      _
    $region19: #{tpu_custom_call.1} parent=1 // pred_check_branch
      %68 = sbr.rel (0) target = $region21
    $region20: #{tpu_custom_call.1} parent=1 // pred_region
      _
    $region21: #{tpu_custom_call.1} parent=1 // pred_fallthru
      _
    // Predicated region
    $region22: #{tpu_custom_call.1} parent=1 // pred_check
      _
    $region23: #{tpu_custom_call.1} parent=1 // pred_check_branch
      %70 = sbr.rel (0) target = $region25
    $region24: #{tpu_custom_call.1} parent=1 // pred_region
      _
    $region25: #{tpu_custom_call.1} parent=1 // pred_fallthru
      _
    // Predicated region
    $region26: #{tpu_custom_call.1} parent=1 // pred_check
      _
    $region27: #{tpu_custom_call.1} parent=1 // pred_check_branch
      %72 = sbr.rel (0) target = $region29
    $region28: #{tpu_custom_call.1} parent=1 // pred_region
      %74 = dma.done [#allocation3], 2048
    $region29: #{tpu_custom_call.1} parent=1 // pred_fallthru
      _
    // Predicated region
    $region30: #{tpu_custom_call.1} parent=1 // pred_check
      _
    $region31: #{tpu_custom_call.1} parent=1 // pred_check_branch
      %76 = sbr.rel (0) target = $region33
    $region32: #{tpu_custom_call.1} parent=1 // pred_region
      %78 = dma.done [#allocation6], 128
    $region33: #{tpu_custom_call.1} parent=1 // pred_fallthru
      _
    // Predicated region
    $region34: #{tpu_custom_call.1} parent=1 // pred_check
      _
    $region35: #{tpu_custom_call.1} parent=1 // pred_check_branch
      %80 = sbr.rel (0) target = $region37
    $region36: #{tpu_custom_call.1} parent=1 // pred_region
      %82 = dma.done [#allocation6], 128
    $region37: #{tpu_custom_call.1} parent=1 // pred_fallthru
      _
    // Predicated region
    $region38: #{tpu_custom_call.1} parent=1 // pred_check
      _
    $region39: #{tpu_custom_call.1} parent=1 // pred_check_branch
      %84 = sbr.rel (0) target = $region41
    $region40: #{tpu_custom_call.1} parent=1 // pred_region
      %86 = dma.done [#allocation9], 512
    $region41: #{tpu_custom_call.1} parent=1 // pred_fallthru
      _
    %v87 = vld [vmem:[#allocation5] sm:$0xff]
    %v88 = vld [vmem:[#allocation7] sm:$0xff]
    %v89 = vld [vmem:[#allocation2] sm:$0xff]
    %v90 = vld [vmem:[#allocation2 + $0x8] sm:$0xff]
    %v91 = vld [vmem:[#allocation2 + $0x10] sm:$0xff]
    %v92 = vld [vmem:[#allocation2 + $0x18] sm:$0xff]
    %v93 = vld [vmem:[#allocation2 + $0x20] sm:$0xff]
    %v94 = vld [vmem:[#allocation2 + $0x28] sm:$0xff]
    %v95 = vld [vmem:[#allocation2 + $0x30] sm:$0xff]
    %v96 = vld [vmem:[#allocation2 + $0x38] sm:$0xff]
    %v97 = vld [vmem:[#allocation2 + $0x40] sm:$0xff]
    %v98 = vld [vmem:[#allocation2 + $0x48] sm:$0xff]
    %v99 = vld [vmem:[#allocation2 + $0x50] sm:$0xff]
    %v100 = vld [vmem:[#allocation2 + $0x58] sm:$0xff]
    %v101 = vld [vmem:[#allocation2 + $0x60] sm:$0xff]
    %v102 = vld [vmem:[#allocation2 + $0x68] sm:$0xff]
    %v103 = vld [vmem:[#allocation2 + $0x70] sm:$0xff]
    %v104 = vld [vmem:[#allocation2 + $0x78] sm:$0xff]
    %v105 = vld [vmem:[#allocation8] sm:$0xff]
    %v106 = vld [vmem:[#allocation8 + $0x8] sm:$0xff]
    %v107 = vld [vmem:[#allocation8 + $0x10] sm:$0xff]
    %v108 = vld [vmem:[#allocation8 + $0x18] sm:$0xff]
    %vm109 = vcmask 261120
    %v111 = vsel %vm109, %v89, 0
    %v114 = vsel %vm109, %v90, 0
    %v117 = vsel %vm109, %v91, 0
    %v120 = vsel %vm109, %v92, 0
    %v123 = vsel %vm109, %v93, 0
    %v126 = vsel %vm109, %v94, 0
    %v129 = vsel %vm109, %v95, 0
    %v132 = vsel %vm109, %v96, 0
    %v135 = vsel %vm109, %v97, 0
    %v138 = vsel %vm109, %v98, 0
    %v141 = vsel %vm109, %v99, 0
    %v144 = vsel %vm109, %v100, 0
    %v147 = vsel %vm109, %v101, 0
    %v150 = vsel %vm109, %v102, 0
    %v153 = vsel %vm109, %v103, 0
    %v156 = vsel %vm109, %v104, 0
    %158 = vmatpush.msra.mxu0 0.0
    %159 = vmatpush.msra.mxu0 0.0
    %160 = vmatpush.msra.mxu0 0.0
    %161 = vmatpush.msra.mxu0 0.0
    %162 = vmatpush.msra.mxu0 0.0
    %163 = vmatpush.msra.mxu0 0.0
    %164 = vmatpush.msra.mxu0 0.0
    %165 = vmatpush.msra.mxu0 0.0
    %166 = vmatpush.msra.mxu0 0.0
    %167 = vmatpush.msra.mxu0 0.0
    %168 = vmatpush.msra.mxu0 0.0
    %169 = vmatpush.msra.mxu0 0.0
    %170 = vmatpush.msra.mxu0 %v108
    %171 = vmatpush.msra.mxu0 %v107
    %172 = vmatpush.msra.mxu0 %v106
    %173 = vmatpush.msra.mxu0 %v105
    %174 = vmatmul.f32.gmra.mxu0 %v111
    %v175 = vpop.f32.mrf.mxu0
    %v176 = vadd.f32 0.0, %v175
    %177 = vmatmul.f32.gmra.mxu0 %v114
    %v178 = vpop.f32.mrf.mxu0
    %v179 = vadd.f32 0.0, %v178
    %180 = vmatmul.f32.gmra.mxu0 %v117
    %v181 = vpop.f32.mrf.mxu0
    %v182 = vadd.f32 0.0, %v181
    %183 = vmatmul.f32.gmra.mxu0 %v120
    %v184 = vpop.f32.mrf.mxu0
    %v185 = vadd.f32 0.0, %v184
    %186 = vmatmul.f32.gmra.mxu0 %v123
    %v187 = vpop.f32.mrf.mxu0
    %v188 = vadd.f32 0.0, %v187
    %189 = vmatmul.f32.gmra.mxu0 %v126
    %v190 = vpop.f32.mrf.mxu0
    %v191 = vadd.f32 0.0, %v190
    %192 = vmatmul.f32.gmra.mxu0 %v129
    %v193 = vpop.f32.mrf.mxu0
    %v194 = vadd.f32 0.0, %v193
    %195 = vmatmul.f32.gmra.mxu0 %v132
    %v196 = vpop.f32.mrf.mxu0
    %v197 = vadd.f32 0.0, %v196
    %198 = vmatmul.f32.gmra.mxu0 %v135
    %v199 = vpop.f32.mrf.mxu0
    %v200 = vadd.f32 0.0, %v199
    %201 = vmatmul.f32.gmra.mxu0 %v138
    %v202 = vpop.f32.mrf.mxu0
    %v203 = vadd.f32 0.0, %v202
    %204 = vmatmul.f32.gmra.mxu0 %v141
    %v205 = vpop.f32.mrf.mxu0
    %v206 = vadd.f32 0.0, %v205
    %207 = vmatmul.f32.gmra.mxu0 %v144
    %v208 = vpop.f32.mrf.mxu0
    %v209 = vadd.f32 0.0, %v208
    %210 = vmatmul.f32.gmra.mxu0 %v147
    %v211 = vpop.f32.mrf.mxu0
    %v212 = vadd.f32 0.0, %v211
    %213 = vmatmul.f32.gmra.mxu0 %v150
    %v214 = vpop.f32.mrf.mxu0
    %v215 = vadd.f32 0.0, %v214
    %216 = vmatmul.f32.gmra.mxu0 %v153
    %v217 = vpop.f32.mrf.mxu0
    %v218 = vadd.f32 0.0, %v217
    %219 = vmatmul.f32.gmra.mxu0 %v156
    %v220 = vpop.f32.mrf.mxu0
    %v221 = vadd.f32 0.0, %v220
    %222 = vdwg.mxu0
    %v223 = vperm.slane %v88, 0
    %v224 = vlaneseq
    %v225 = vshrl.u32 %v224, 7
    %227 = vset.pattern.permute.xlu0 %v225
    %228 = vperm.xlu0 %227, %v223
    %v229 = vpop.permute.xlu0 %228
    %v230 = vlaneseq
    %v231 = vshrl.u32 %v230, 7
    %v232 = vadd.s32 %v231, 8
    %233 = vset.pattern.permute.xlu0 %v232
    %234 = vperm.xlu0 %233, %v223
    %v235 = vpop.permute.xlu0 %234
    %v236 = vperm.slane %v88, 1
    %v237 = vlaneseq
    %v238 = vshrl.u32 %v237, 7
    %240 = vset.pattern.permute.xlu0 %v238
    %241 = vperm.xlu0 %240, %v236
    %v242 = vpop.permute.xlu0 %241
    %v243 = vlaneseq
    %v244 = vshrl.u32 %v243, 7
    %v245 = vadd.s32 %v244, 8
    %246 = vset.pattern.permute.xlu0 %v245
    %247 = vperm.xlu0 %246, %v236
    %v248 = vpop.permute.xlu0 %247
    %v249 = vperm.slane %v88, 2
    %v250 = vlaneseq
    %v251 = vshrl.u32 %v250, 7
    %253 = vset.pattern.permute.xlu0 %v251
    %254 = vperm.xlu0 %253, %v249
    %v255 = vpop.permute.xlu0 %254
    %v256 = vlaneseq
    %v257 = vshrl.u32 %v256, 7
    %v258 = vadd.s32 %v257, 8
    %259 = vset.pattern.permute.xlu0 %v258
    %260 = vperm.xlu0 %259, %v249
    %v261 = vpop.permute.xlu0 %260
    %v262 = vperm.slane %v88, 3
    %v263 = vlaneseq
    %v264 = vshrl.u32 %v263, 7
    %266 = vset.pattern.permute.xlu0 %v264
    %267 = vperm.xlu0 %266, %v262
    %v268 = vpop.permute.xlu0 %267
    %v269 = vlaneseq
    %v270 = vshrl.u32 %v269, 7
    %v271 = vadd.s32 %v270, 8
    %272 = vset.pattern.permute.xlu0 %v271
    %273 = vperm.xlu0 %272, %v262
    %v274 = vpop.permute.xlu0 %273
    %v275 = vperm.slane %v88, 4
    %v276 = vlaneseq
    %v277 = vshrl.u32 %v276, 7
    %279 = vset.pattern.permute.xlu0 %v277
    %280 = vperm.xlu0 %279, %v275
    %v281 = vpop.permute.xlu0 %280
    %v282 = vlaneseq
    %v283 = vshrl.u32 %v282, 7
    %v284 = vadd.s32 %v283, 8
    %285 = vset.pattern.permute.xlu0 %v284
    %286 = vperm.xlu0 %285, %v275
    %v287 = vpop.permute.xlu0 %286
    %v288 = vperm.slane %v88, 5
    %v289 = vlaneseq
    %v290 = vshrl.u32 %v289, 7
    %292 = vset.pattern.permute.xlu0 %v290
    %293 = vperm.xlu0 %292, %v288
    %v294 = vpop.permute.xlu0 %293
    %v295 = vlaneseq
    %v296 = vshrl.u32 %v295, 7
    %v297 = vadd.s32 %v296, 8
    %298 = vset.pattern.permute.xlu0 %v297
    %299 = vperm.xlu0 %298, %v288
    %v300 = vpop.permute.xlu0 %299
    %v301 = vperm.slane %v88, 6
    %v302 = vlaneseq
    %v303 = vshrl.u32 %v302, 7
    %305 = vset.pattern.permute.xlu0 %v303
    %306 = vperm.xlu0 %305, %v301
    %v307 = vpop.permute.xlu0 %306
    %v308 = vlaneseq
    %v309 = vshrl.u32 %v308, 7
    %v310 = vadd.s32 %v309, 8
    %311 = vset.pattern.permute.xlu0 %v310
    %312 = vperm.xlu0 %311, %v301
    %v313 = vpop.permute.xlu0 %312
    %v314 = vperm.slane %v88, 7
    %v315 = vlaneseq
    %v316 = vshrl.u32 %v315, 7
    %318 = vset.pattern.permute.xlu0 %v316
    %319 = vperm.xlu0 %318, %v314
    %v320 = vpop.permute.xlu0 %319
    %v321 = vlaneseq
    %v322 = vshrl.u32 %v321, 7
    %v323 = vadd.s32 %v322, 8
    %324 = vset.pattern.permute.xlu0 %v323
    %325 = vperm.xlu0 %324, %v314
    %v326 = vpop.permute.xlu0 %325
    %v327 = vld [vmem:[%s4] sm:$0x1]
    %v329 = vperm.slane %v327, 0
    %v331 = vmul.f32 %v229, %v329
    %v332 = vmul.f32 %v235, %v329
    %v333 = vmul.f32 %v242, %v329
    %v334 = vmul.f32 %v248, %v329
    %v335 = vmul.f32 %v255, %v329
    %v336 = vmul.f32 %v261, %v329
    %v337 = vmul.f32 %v268, %v329
    %v338 = vmul.f32 %v274, %v329
    %v339 = vmul.f32 %v281, %v329
    %v340 = vmul.f32 %v287, %v329
    %v341 = vmul.f32 %v294, %v329
    %v342 = vmul.f32 %v300, %v329
    %v343 = vmul.f32 %v307, %v329
    %v344 = vmul.f32 %v313, %v329
    %v345 = vmul.f32 %v320, %v329
    %v346 = vmul.f32 %v326, %v329
    %v348 = vrot.slane %v87, 1
    %v349 = vrot.slane %v87, 2
    %v350 = vrot.slane %v87, 3
    %v351 = vrot.slane %v87, 4
    %v352 = vrot.slane %v87, 5
    %v353 = vrot.slane %v87, 6
    %v354 = vrot.slane %v87, 7
    %v355 = vperm.slane %v87, 0
    %v356 = vperm.slane %v348, 0
    %v357 = vperm.slane %v349, 0
    %v358 = vperm.slane %v350, 0
    %v359 = vperm.slane %v351, 0
    %v360 = vperm.slane %v352, 0
    %v361 = vperm.slane %v353, 0
    %v362 = vperm.slane %v354, 0
    %v371 = vadd.f32 %v176, %v355
    %v372 = vadd.f32 %v179, %v355
    %v373 = vadd.f32 %v182, %v356
    %v374 = vadd.f32 %v185, %v356
    %v375 = vadd.f32 %v188, %v357
    %v376 = vadd.f32 %v191, %v357
    %v377 = vadd.f32 %v194, %v358
    %v378 = vadd.f32 %v197, %v358
    %v379 = vadd.f32 %v200, %v359
    %v380 = vadd.f32 %v203, %v359
    %v381 = vadd.f32 %v206, %v360
    %v382 = vadd.f32 %v209, %v360
    %v383 = vadd.f32 %v212, %v361
    %v384 = vadd.f32 %v215, %v361
    %v385 = vadd.f32 %v218, %v362
    %v386 = vadd.f32 %v221, %v362
    %v387 = vadd.f32 %v371, %v331
    %v388 = vadd.f32 %v372, %v332
    %v389 = vadd.f32 %v373, %v333
    %v390 = vadd.f32 %v374, %v334
    %v391 = vadd.f32 %v375, %v335
    %v392 = vadd.f32 %v376, %v336
    %v393 = vadd.f32 %v377, %v337
    %v394 = vadd.f32 %v378, %v338
    %v395 = vadd.f32 %v379, %v339
    %v396 = vadd.f32 %v380, %v340
    %v397 = vadd.f32 %v381, %v341
    %v398 = vadd.f32 %v382, %v342
    %v399 = vadd.f32 %v383, %v343
    %v400 = vadd.f32 %v384, %v344
    %v401 = vadd.f32 %v385, %v345
    %v402 = vadd.f32 %v386, %v346
    %v403 = vtanh.pop %v387
    %v404 = vtanh.pop %v388
    %v405 = vtanh.pop %v389
    %v406 = vtanh.pop %v390
    %v407 = vtanh.pop %v391
    %v408 = vtanh.pop %v392
    %v409 = vtanh.pop %v393
    %v410 = vtanh.pop %v394
    %v411 = vtanh.pop %v395
    %v412 = vtanh.pop %v396
    %v413 = vtanh.pop %v397
    %v414 = vtanh.pop %v398
    %v415 = vtanh.pop %v399
    %v416 = vtanh.pop %v400
    %v417 = vtanh.pop %v401
    %v418 = vtanh.pop %v402
    %v419 = vld [vmem:[%s5] sm:$0x1]
    %v421 = vperm.slane %v419, 0
    %v423 = vmul.f32 %v403, %v421
    %v424 = vmul.f32 %v404, %v421
    %v425 = vmul.f32 %v405, %v421
    %v426 = vmul.f32 %v406, %v421
    %v427 = vmul.f32 %v407, %v421
    %v428 = vmul.f32 %v408, %v421
    %v429 = vmul.f32 %v409, %v421
    %v430 = vmul.f32 %v410, %v421
    %v431 = vmul.f32 %v411, %v421
    %v432 = vmul.f32 %v412, %v421
    %v433 = vmul.f32 %v413, %v421
    %v434 = vmul.f32 %v414, %v421
    %v435 = vmul.f32 %v415, %v421
    %v436 = vmul.f32 %v416, %v421
    %v437 = vmul.f32 %v417, %v421
    %v438 = vmul.f32 %v418, %v421
    %439 = vadd.xlane.f32.xlu0 %v423
    %v440 = vpop.xlane.xlu0 %439
    %441 = vadd.xlane.f32.xlu0 %v424
    %v442 = vpop.xlane.xlu0 %441
    %443 = vadd.xlane.f32.xlu0 %v425
    %v444 = vpop.xlane.xlu0 %443
    %445 = vadd.xlane.f32.xlu0 %v426
    %v446 = vpop.xlane.xlu0 %445
    %447 = vadd.xlane.f32.xlu0 %v427
    %v448 = vpop.xlane.xlu0 %447
    %449 = vadd.xlane.f32.xlu0 %v428
    %v450 = vpop.xlane.xlu0 %449
    %451 = vadd.xlane.f32.xlu0 %v429
    %v452 = vpop.xlane.xlu0 %451
    %453 = vadd.xlane.f32.xlu0 %v430
    %v454 = vpop.xlane.xlu0 %453
    %455 = vadd.xlane.f32.xlu0 %v431
    %v456 = vpop.xlane.xlu0 %455
    %457 = vadd.xlane.f32.xlu0 %v432
    %v458 = vpop.xlane.xlu0 %457
    %459 = vadd.xlane.f32.xlu0 %v433
    %v460 = vpop.xlane.xlu0 %459
    %461 = vadd.xlane.f32.xlu0 %v434
    %v462 = vpop.xlane.xlu0 %461
    %463 = vadd.xlane.f32.xlu0 %v435
    %v464 = vpop.xlane.xlu0 %463
    %465 = vadd.xlane.f32.xlu0 %v436
    %v466 = vpop.xlane.xlu0 %465
    %467 = vadd.xlane.f32.xlu0 %v437
    %v468 = vpop.xlane.xlu0 %467
    %469 = vadd.xlane.f32.xlu0 %v438
    %v470 = vpop.xlane.xlu0 %469
    %v487 = vlaneseq
    %v488 = vand.u32 %v487, 127
    %v489 = vperm.slane %v440, %v488
    %v490 = vadd.s32 %v488, 4294967288
    %v491 = vperm.slane %v442, %v490
    %vm492 = vcmask 130112
    %v493 = vsel %vm492, %v491, %v489
    %v494 = vperm.slane %v444, %v488
    %v495 = vperm.slane %v446, %v490
    %v496 = vsel %vm492, %v495, %v494
    %v497 = vperm.slane %v448, %v488
    %v498 = vperm.slane %v450, %v490
    %v499 = vsel %vm492, %v498, %v497
    %v500 = vperm.slane %v452, %v488
    %v501 = vperm.slane %v454, %v490
    %v502 = vsel %vm492, %v501, %v500
    %v503 = vperm.slane %v456, %v488
    %v504 = vperm.slane %v458, %v490
    %v505 = vsel %vm492, %v504, %v503
    %v506 = vperm.slane %v460, %v488
    %v507 = vperm.slane %v462, %v490
    %v508 = vsel %vm492, %v507, %v506
    %v509 = vperm.slane %v464, %v488
    %v510 = vperm.slane %v466, %v490
    %v511 = vsel %vm492, %v510, %v509
    %v512 = vperm.slane %v468, %v488
    %v513 = vperm.slane %v470, %v490
    %v514 = vsel %vm492, %v513, %v512
    %vm515 = vcmask 1041409
    %v516 = vsel %vm515, %v496, %v493
    %vm517 = vcmask 1042434
    %v518 = vsel %vm517, %v499, %v516
    %vm519 = vcmask 1043459
    %v520 = vsel %vm519, %v502, %v518
    %vm521 = vcmask 1044484
    %v522 = vsel %vm521, %v505, %v520
    %vm523 = vcmask 1045509
    %v524 = vsel %vm523, %v508, %v522
    %vm525 = vcmask 1046534
    %v526 = vsel %vm525, %v511, %v524
    %vm527 = vcmask 1047559
    %v528 = vsel %vm527, %v514, %v526
    %vm530 = vcmask 130048
    %v531 = vsel %vm530, %v528, -inf
    %532 = vmax.xlane.f32.xlu0 %v531
    %v533 = vpop.xlane.xlu0 %532
    %v535 = vperm.slane %v533, 0
    %v536 = vperm.slane %v533, 1
    %v537 = vperm.slane %v533, 2
    %v538 = vperm.slane %v533, 3
    %v539 = vperm.slane %v533, 4
    %v540 = vperm.slane %v533, 5
    %v541 = vperm.slane %v533, 6
    %v542 = vperm.slane %v533, 7
    %v551 = vsub.f32 %v440, %v535
    %v552 = vsub.f32 %v442, %v535
    %v553 = vsub.f32 %v444, %v536
    %v554 = vsub.f32 %v446, %v536
    %v555 = vsub.f32 %v448, %v537
    %v556 = vsub.f32 %v450, %v537
    %v557 = vsub.f32 %v452, %v538
    %v558 = vsub.f32 %v454, %v538
    %v559 = vsub.f32 %v456, %v539
    %v560 = vsub.f32 %v458, %v539
    %v561 = vsub.f32 %v460, %v540
    %v562 = vsub.f32 %v462, %v540
    %v563 = vsub.f32 %v464, %v541
    %v564 = vsub.f32 %v466, %v541
    %v565 = vsub.f32 %v468, %v542
    %v566 = vsub.f32 %v470, %v542
    %v567 = vmul.f32 %v551, 1.442695
    %v568 = vpow.pop %v567
    %v569 = vmul.f32 %v552, 1.442695
    %v570 = vpow.pop %v569
    %v571 = vmul.f32 %v553, 1.442695
    %v572 = vpow.pop %v571
    %v573 = vmul.f32 %v554, 1.442695
    %v574 = vpow.pop %v573
    %v575 = vmul.f32 %v555, 1.442695
    %v576 = vpow.pop %v575
    %v577 = vmul.f32 %v556, 1.442695
    %v578 = vpow.pop %v577
    %v579 = vmul.f32 %v557, 1.442695
    %v580 = vpow.pop %v579
    %v581 = vmul.f32 %v558, 1.442695
    %v582 = vpow.pop %v581
    %v583 = vmul.f32 %v559, 1.442695
    %v584 = vpow.pop %v583
    %v585 = vmul.f32 %v560, 1.442695
    %v586 = vpow.pop %v585
    %v587 = vmul.f32 %v561, 1.442695
    %v588 = vpow.pop %v587
    %v589 = vmul.f32 %v562, 1.442695
    %v590 = vpow.pop %v589
    %v591 = vmul.f32 %v563, 1.442695
    %v592 = vpow.pop %v591
    %v593 = vmul.f32 %v564, 1.442695
    %v594 = vpow.pop %v593
    %v595 = vmul.f32 %v565, 1.442695
    %v596 = vpow.pop %v595
    %v597 = vmul.f32 %v566, 1.442695
    %v598 = vpow.pop %v597
    %615 = vset.pattern.permute.xlu0 0
    %616 = vperm.xlu0 %615, %v568
    %v617 = vpop.permute.xlu0 %616
    %618 = vset.pattern.permute.xlu0 0
    %619 = vperm.xlu0 %618, %v570
    %v620 = vpop.permute.xlu0 %619
    %621 = vset.pattern.permute.xlu0 0
    %622 = vperm.xlu0 %621, %v572
    %v623 = vpop.permute.xlu0 %622
    %624 = vset.pattern.permute.xlu0 0
    %625 = vperm.xlu0 %624, %v574
    %v626 = vpop.permute.xlu0 %625
    %627 = vset.pattern.permute.xlu0 0
    %628 = vperm.xlu0 %627, %v576
    %v629 = vpop.permute.xlu0 %628
    %630 = vset.pattern.permute.xlu0 0
    %631 = vperm.xlu0 %630, %v578
    %v632 = vpop.permute.xlu0 %631
    %633 = vset.pattern.permute.xlu0 0
    %634 = vperm.xlu0 %633, %v580
    %v635 = vpop.permute.xlu0 %634
    %636 = vset.pattern.permute.xlu0 0
    %637 = vperm.xlu0 %636, %v582
    %v638 = vpop.permute.xlu0 %637
    %639 = vset.pattern.permute.xlu0 0
    %640 = vperm.xlu0 %639, %v584
    %v641 = vpop.permute.xlu0 %640
    %642 = vset.pattern.permute.xlu0 0
    %643 = vperm.xlu0 %642, %v586
    %v644 = vpop.permute.xlu0 %643
    %645 = vset.pattern.permute.xlu0 0
    %646 = vperm.xlu0 %645, %v588
    %v647 = vpop.permute.xlu0 %646
    %648 = vset.pattern.permute.xlu0 0
    %649 = vperm.xlu0 %648, %v590
    %v650 = vpop.permute.xlu0 %649
    %651 = vset.pattern.permute.xlu0 0
    %652 = vperm.xlu0 %651, %v592
    %v653 = vpop.permute.xlu0 %652
    %654 = vset.pattern.permute.xlu0 0
    %655 = vperm.xlu0 %654, %v594
    %v656 = vpop.permute.xlu0 %655
    %657 = vset.pattern.permute.xlu0 0
    %658 = vperm.xlu0 %657, %v596
    %v659 = vpop.permute.xlu0 %658
    %660 = vset.pattern.permute.xlu0 0
    %661 = vperm.xlu0 %660, %v598
    %v662 = vpop.permute.xlu0 %661
    %v663 = vperm.slane %v617, %v488
    %v664 = vperm.slane %v620, %v490
    %v665 = vsel %vm492, %v664, %v663
    %v666 = vperm.slane %v623, %v488
    %v667 = vperm.slane %v626, %v490
    %v668 = vsel %vm492, %v667, %v666
    %v669 = vperm.slane %v629, %v488
    %v670 = vperm.slane %v632, %v490
    %v671 = vsel %vm492, %v670, %v669
    %v672 = vperm.slane %v635, %v488
    %v673 = vperm.slane %v638, %v490
    %v674 = vsel %vm492, %v673, %v672
    %v675 = vperm.slane %v641, %v488
    %v676 = vperm.slane %v644, %v490
    %v677 = vsel %vm492, %v676, %v675
    %v678 = vperm.slane %v647, %v488
    %v679 = vperm.slane %v650, %v490
    %v680 = vsel %vm492, %v679, %v678
    %v681 = vperm.slane %v653, %v488
    %v682 = vperm.slane %v656, %v490
    %v683 = vsel %vm492, %v682, %v681
    %v684 = vperm.slane %v659, %v488
    %v685 = vperm.slane %v662, %v490
    %v686 = vsel %vm492, %v685, %v684
    %v687 = vsel %vm515, %v668, %v665
    %v688 = vsel %vm517, %v671, %v687
    %v689 = vsel %vm519, %v674, %v688
    %v690 = vsel %vm521, %v677, %v689
    %v691 = vsel %vm523, %v680, %v690
    %v692 = vsel %vm525, %v683, %v691
    %v693 = vsel %vm527, %v686, %v692
    %v695 = vsel %vm530, %v693, 0.0
    %696 = vadd.xlane.f32.xlu0 %v695
    %v697 = vpop.xlane.xlu0 %696
    %v698 = vrcp.pop %v697
    %v699 = vmul.f32 %v697, %v698
    %v700 = vsub.f32 1.0, %v699
    %v701 = vmul.f32 %v698, %v700
    %v702 = vadd.f32 %v698, %v701
    %vm703 = vweird.f32 %v697
    %vm704 = vweird.f32 %v698
    %vm705 = vmor %vm703, %vm704
    %v706 = vsel %vm705, %v698, %v702
    %v707 = vand.u32 2147483647, %v697
    %vm708 = vcmp.eq.f32.partialorder %v707, 8.507059e+37
    %v709 = vand.u32 %v697, 2147483648
    %v710 = vor.u32 1.1754944e-38, %v709
    %v711 = vsel %vm708, %v710, %v706
    %v713 = vperm.slane %v711, 0
    %v714 = vperm.slane %v711, 1
    %v715 = vperm.slane %v711, 2
    %v716 = vperm.slane %v711, 3
    %v717 = vperm.slane %v711, 4
    %v718 = vperm.slane %v711, 5
    %v719 = vperm.slane %v711, 6
    %v720 = vperm.slane %v711, 7
    %v729 = vmul.f32 %v568, %v713
    %v730 = vmul.f32 %v570, %v713
    %v731 = vmul.f32 %v572, %v714
    %v732 = vmul.f32 %v574, %v714
    %v733 = vmul.f32 %v576, %v715
    %v734 = vmul.f32 %v578, %v715
    %v735 = vmul.f32 %v580, %v716
    %v736 = vmul.f32 %v582, %v716
    %v737 = vmul.f32 %v584, %v717
    %v738 = vmul.f32 %v586, %v717
    %v739 = vmul.f32 %v588, %v718
    %v740 = vmul.f32 %v590, %v718
    %v741 = vmul.f32 %v592, %v719
    %v742 = vmul.f32 %v594, %v719
    %v743 = vmul.f32 %v596, %v720
    %v744 = vmul.f32 %v598, %v720
    %746 = vset.pattern.permute.xlu0 0
    %747 = vperm.xlu0 %746, %v729
    %v748 = vpop.permute.xlu0 %747
    %751 = vset.pattern.permute.xlu0 0
    %752 = vperm.xlu0 %751, %v730
    %v753 = vpop.permute.xlu0 %752
    %756 = vset.pattern.permute.xlu0 0
    %757 = vperm.xlu0 %756, %v731
    %v758 = vpop.permute.xlu0 %757
    %761 = vset.pattern.permute.xlu0 0
    %762 = vperm.xlu0 %761, %v732
    %v763 = vpop.permute.xlu0 %762
    %766 = vset.pattern.permute.xlu0 0
    %767 = vperm.xlu0 %766, %v733
    %v768 = vpop.permute.xlu0 %767
    %771 = vset.pattern.permute.xlu0 0
    %772 = vperm.xlu0 %771, %v734
    %v773 = vpop.permute.xlu0 %772
    %776 = vset.pattern.permute.xlu0 0
    %777 = vperm.xlu0 %776, %v735
    %v778 = vpop.permute.xlu0 %777
    %781 = vset.pattern.permute.xlu0 0
    %782 = vperm.xlu0 %781, %v736
    %v783 = vpop.permute.xlu0 %782
    %786 = vset.pattern.permute.xlu0 0
    %787 = vperm.xlu0 %786, %v737
    %v788 = vpop.permute.xlu0 %787
    %791 = vset.pattern.permute.xlu0 0
    %792 = vperm.xlu0 %791, %v738
    %v793 = vpop.permute.xlu0 %792
    %796 = vset.pattern.permute.xlu0 0
    %797 = vperm.xlu0 %796, %v739
    %v798 = vpop.permute.xlu0 %797
    %801 = vset.pattern.permute.xlu0 0
    %802 = vperm.xlu0 %801, %v740
    %v803 = vpop.permute.xlu0 %802
    %806 = vset.pattern.permute.xlu0 0
    %807 = vperm.xlu0 %806, %v741
    %v808 = vpop.permute.xlu0 %807
    %811 = vset.pattern.permute.xlu0 0
    %812 = vperm.xlu0 %811, %v742
    %v813 = vpop.permute.xlu0 %812
    %816 = vset.pattern.permute.xlu0 0
    %817 = vperm.xlu0 %816, %v743
    %v818 = vpop.permute.xlu0 %817
    %821 = vset.pattern.permute.xlu0 0
    %822 = vperm.xlu0 %821, %v744
    %v823 = vpop.permute.xlu0 %822
    %v825 = vmul.f32 %v89, %v748
    %v826 = vmul.f32 %v90, %v753
    %v827 = vmul.f32 %v91, %v758
    %v828 = vmul.f32 %v92, %v763
    %v829 = vmul.f32 %v93, %v768
    %v830 = vmul.f32 %v94, %v773
    %v831 = vmul.f32 %v95, %v778
    %v832 = vmul.f32 %v96, %v783
    %v833 = vmul.f32 %v97, %v788
    %v834 = vmul.f32 %v98, %v793
    %v835 = vmul.f32 %v99, %v798
    %v836 = vmul.f32 %v100, %v803
    %v837 = vmul.f32 %v101, %v808
    %v838 = vmul.f32 %v102, %v813
    %v839 = vmul.f32 %v103, %v818
    %v840 = vmul.f32 %v104, %v823
    %v841 = vsel %vm109, %v825, 0.0
    %v842 = vsel %vm109, %v826, 0.0
    %v843 = vadd.f32 %v841, %v842
    %v844 = vrot.slane %v843, 4
    %v845 = vadd.f32 %v843, %v844
    %v846 = vrot.slane %v845, 2
    %v847 = vadd.f32 %v845, %v846
    %v848 = vrot.slane %v847, 1
    %v849 = vadd.f32 %v847, %v848
    %v850 = vsel %vm109, %v827, 0.0
    %v851 = vsel %vm109, %v828, 0.0
    %v852 = vadd.f32 %v850, %v851
    %v853 = vrot.slane %v852, 4
    %v854 = vadd.f32 %v852, %v853
    %v855 = vrot.slane %v854, 2
    %v856 = vadd.f32 %v854, %v855
    %v857 = vrot.slane %v856, 1
    %v858 = vadd.f32 %v856, %v857
    %v859 = vsel %vm109, %v829, 0.0
    %v860 = vsel %vm109, %v830, 0.0
    %v861 = vadd.f32 %v859, %v860
    %v862 = vrot.slane %v861, 4
    %v863 = vadd.f32 %v861, %v862
    %v864 = vrot.slane %v863, 2
    %v865 = vadd.f32 %v863, %v864
    %v866 = vrot.slane %v865, 1
    %v867 = vadd.f32 %v865, %v866
    %v868 = vsel %vm109, %v831, 0.0
    %v869 = vsel %vm109, %v832, 0.0
    %v870 = vadd.f32 %v868, %v869
    %v871 = vrot.slane %v870, 4
    %v872 = vadd.f32 %v870, %v871
    %v873 = vrot.slane %v872, 2
    %v874 = vadd.f32 %v872, %v873
    %v875 = vrot.slane %v874, 1
    %v876 = vadd.f32 %v874, %v875
    %v877 = vsel %vm109, %v833, 0.0
    %v878 = vsel %vm109, %v834, 0.0
    %v879 = vadd.f32 %v877, %v878
    %v880 = vrot.slane %v879, 4
    %v881 = vadd.f32 %v879, %v880
    %v882 = vrot.slane %v881, 2
    %v883 = vadd.f32 %v881, %v882
    %v884 = vrot.slane %v883, 1
    %v885 = vadd.f32 %v883, %v884
    %v886 = vsel %vm109, %v835, 0.0
    %v887 = vsel %vm109, %v836, 0.0
    %v888 = vadd.f32 %v886, %v887
    %v889 = vrot.slane %v888, 4
    %v890 = vadd.f32 %v888, %v889
    %v891 = vrot.slane %v890, 2
    %v892 = vadd.f32 %v890, %v891
    %v893 = vrot.slane %v892, 1
    %v894 = vadd.f32 %v892, %v893
    %v895 = vsel %vm109, %v837, 0.0
    %v896 = vsel %vm109, %v838, 0.0
    %v897 = vadd.f32 %v895, %v896
    %v898 = vrot.slane %v897, 4
    %v899 = vadd.f32 %v897, %v898
    %v900 = vrot.slane %v899, 2
    %v901 = vadd.f32 %v899, %v900
    %v902 = vrot.slane %v901, 1
    %v903 = vadd.f32 %v901, %v902
    %v904 = vsel %vm109, %v839, 0.0
    %v905 = vsel %vm109, %v840, 0.0
    %v906 = vadd.f32 %v904, %v905
    %v907 = vrot.slane %v906, 4
    %v908 = vadd.f32 %v906, %v907
    %v909 = vrot.slane %v908, 2
    %v910 = vadd.f32 %v908, %v909
    %v911 = vrot.slane %v910, 1
    %v912 = vadd.f32 %v910, %v911
    %v921 = vsel %vm515, %v858, %v849
    %v922 = vsel %vm517, %v867, %v921
    %v923 = vsel %vm519, %v876, %v922
    %v924 = vsel %vm521, %v885, %v923
    %v925 = vsel %vm523, %v894, %v924
    %v926 = vsel %vm525, %v903, %v925
    %v927 = vsel %vm527, %v912, %v926
    %929 = vst.msk [vmem:[#allocation10] sm:$0xff] %vm109, %v927
    %v930 = vperm.slane %v748, %v488
    %v931 = vperm.slane %v753, %v490
    %v932 = vsel %vm492, %v931, %v930
    %v933 = vperm.slane %v758, %v488
    %v934 = vperm.slane %v763, %v490
    %v935 = vsel %vm492, %v934, %v933
    %v936 = vperm.slane %v768, %v488
    %v937 = vperm.slane %v773, %v490
    %v938 = vsel %vm492, %v937, %v936
    %v939 = vperm.slane %v778, %v488
    %v940 = vperm.slane %v783, %v490
    %v941 = vsel %vm492, %v940, %v939
    %v942 = vperm.slane %v788, %v488
    %v943 = vperm.slane %v793, %v490
    %v944 = vsel %vm492, %v943, %v942
    %v945 = vperm.slane %v798, %v488
    %v946 = vperm.slane %v803, %v490
    %v947 = vsel %vm492, %v946, %v945
    %v948 = vperm.slane %v808, %v488
    %v949 = vperm.slane %v813, %v490
    %v950 = vsel %vm492, %v949, %v948
    %v951 = vperm.slane %v818, %v488
    %v952 = vperm.slane %v823, %v490
    %v953 = vsel %vm492, %v952, %v951
    %v954 = vsel %vm515, %v935, %v932
    %v955 = vsel %vm517, %v938, %v954
    %v956 = vsel %vm519, %v941, %v955
    %v957 = vsel %vm521, %v944, %v956
    %v958 = vsel %vm523, %v947, %v957
    %v959 = vsel %vm525, %v950, %v958
    %v960 = vsel %vm527, %v953, %v959
    %962 = vst.msk [vmem:[#allocation11] sm:$0xff] %vm530, %v960
    %v963 = vadd.f32 %v88, %v960
    %964 = vst.msk [vmem:[#allocation13] sm:$0xff] %vm530, %v963
    // Predicated region
    $region42: #{tpu_custom_call.1} parent=1 // pred_check
      _
    $region43: #{tpu_custom_call.1} parent=1 // pred_check_branch
      %966 = sbr.rel (0) target = $region45
    $region44: #{tpu_custom_call.1} parent=1 // pred_region
      %968 = vsyncadd [#allocation4], 0
      %s970 = sshll.u32 [#allocation10], 4
      %s971 = int_to_ptr.vmem [resolvable:$true] %s970
      %s972 = sshll.u32 %s6, 4
      %s973 = int_to_ptr.hbm [resolvable:$true] %s972
      %975 = dma.vmem_to_hbm [thread:$0]  %s971, 128, %s973, [#allocation4]
    $region45: #{tpu_custom_call.1} parent=1 // pred_fallthru
      _
    // Predicated region
    $region46: #{tpu_custom_call.1} parent=1 // pred_check
      _
    $region47: #{tpu_custom_call.1} parent=1 // pred_check_branch
      %977 = sbr.rel (0) target = $region49
    $region48: #{tpu_custom_call.1} parent=1 // pred_region
      %979 = vsyncadd [#allocation12], 0
      %s981 = sshll.u32 [#allocation11], 4
      %s982 = int_to_ptr.vmem [resolvable:$true] %s981
      %s983 = sshll.u32 %s7, 4
      %s984 = int_to_ptr.hbm [resolvable:$true] %s983
      %986 = dma.vmem_to_hbm [thread:$0]  %s982, 128, %s984, [#allocation12]
    $region49: #{tpu_custom_call.1} parent=1 // pred_fallthru
      _
    // Predicated region
    $region50: #{tpu_custom_call.1} parent=1 // pred_check
      _
    $region51: #{tpu_custom_call.1} parent=1 // pred_check_branch
      %988 = sbr.rel (0) target = $region53
    $region52: #{tpu_custom_call.1} parent=1 // pred_region
      %990 = vsyncadd [#allocation12], 0
      %s992 = sshll.u32 [#allocation13], 4
      %s993 = int_to_ptr.vmem [resolvable:$true] %s992
      %s994 = sshll.u32 %s8, 4
      %s995 = int_to_ptr.hbm [resolvable:$true] %s994
      %997 = dma.vmem_to_hbm [thread:$0]  %s993, 128, %s995, [#allocation12]
    $region53: #{tpu_custom_call.1} parent=1 // pred_fallthru
      _
    // Predicated region
    $region54: #{tpu_custom_call.1} parent=1 // pred_check
      _
    $region55: #{tpu_custom_call.1} parent=1 // pred_check_branch
      %999 = sbr.rel (0) target = $region57
    $region56: #{tpu_custom_call.1} parent=1 // pred_region
      %1001 = dma.done [#allocation4], 128
    $region57: #{tpu_custom_call.1} parent=1 // pred_fallthru
      _
    // Predicated region
    $region58: #{tpu_custom_call.1} parent=1 // pred_check
      _
    $region59: #{tpu_custom_call.1} parent=1 // pred_check_branch
      %1003 = sbr.rel (0) target = $region61
    $region60: #{tpu_custom_call.1} parent=1 // pred_region
      %1005 = dma.done [#allocation12], 128
    $region61: #{tpu_custom_call.1} parent=1 // pred_fallthru
      _
    // Predicated region
    $region62: #{tpu_custom_call.1} parent=1 // pred_check
      _
    $region63: #{tpu_custom_call.1} parent=1 // pred_check_branch
      %1007 = sbr.rel (0) target = $region65
    $region64: #{tpu_custom_call.1} parent=1 // pred_region
      %1009 = dma.done [#allocation12], 128
    $region65: #{tpu_custom_call.1} parent=1 // pred_fallthru
      _
    %1010 = vsyncpa [#allocation3], 1
    %1011 = vsyncpa [#allocation6], 1
    %1012 = vsyncpa [#allocation9], 1
    %1013 = vsyncpa [#allocation4], 1
    %1014 = vsyncpa [#allocation12], 1

</llo_original>
